<compile_context>
chip_gen: v7x
topology: tpu7x:2x2x1
jax: 0.10.0
libtpu: 0.0.40
codegen_flags: <defaults>
</compile_context>

<pallas_src>
import jax
import jax.numpy as jnp
from jax.experimental import pallas as pl
from jax.experimental.pallas import tpu as pltpu


def se_block_kernel(x_ref, wd_ref, bd_ref, wu_ref, bu_ref, o_ref):
    # x_ref / o_ref : (Nb, HW, C) channels-last slabs (C on lanes).
    # wd_ref: (C, I)   bd_ref: (1, I)
    # wu_ref: (I, C)   bu_ref: (1, C)

    # Global average pool over the spatial (sublane) axis, f32 accumulation.
    pooled = jnp.mean(x_ref[...].astype(jnp.float32), axis=1)          # (Nb, C)

    # Down 1x1 conv + ReLU -> (Nb, I).
    hidden = jnp.dot(pooled, wd_ref[...].astype(jnp.float32),
                     preferred_element_type=jnp.float32)
    hidden = jnp.maximum(hidden + bd_ref[...].astype(jnp.float32), 0.0)

    # Up 1x1 conv + sigmoid -> (Nb, C).
    logits = jnp.dot(hidden, wu_ref[...].astype(jnp.float32),
                     preferred_element_type=jnp.float32)
    scale = jax.nn.sigmoid(logits + bu_ref[...].astype(jnp.float32))

    # Broadcast-multiply over the spatial axis. Reload x from VMEM for the
    # streaming vld->vmul->vst pass instead of keeping the whole slab value
    # live across the pool/MLP (keeps vreg pressure low, esp. on v5e).
    scale = scale.astype(o_ref.dtype)[:, None, :]                      # (Nb, 1, C)
    o_ref[...] = x_ref[...].astype(o_ref.dtype) * scale


def _pick_batch_block(n, hw, c, itemsize, vmem_budget_bytes):
    """Largest divisor Nb of n s.t. double-buffered in+out slabs fit the budget."""
    per_batch = hw * c * itemsize
    max_nb = max(1, vmem_budget_bytes // (4 * per_batch))  # 2 bufs x (in + out)
    nb = 1
    for d in range(1, n + 1):
        if n % d == 0 and d <= max_nb:
            nb = d
    return nb


def se_block(x_nchw, w_down, b_down, w_up, b_up):
    """SEBlock forward.  x_nchw: (N, C, H, W).  Returns (N, C, H, W)."""
    N, C, H, W = x_nchw.shape
    # TODO(synk): non-square inputs (avg_pool2d(kernel_size=W) with H != W is a
    # strided pool, not a global pool) are not implemented.
    assert H == W, "SEBlock kernel assumes H == W (global average pool)"
    HW = H * W
    I = w_down.shape[0]
    itemsize = jnp.dtype(x_nchw.dtype).itemsize

    # Channels-last layout: (N, HW, C) so C lands on the lane dimension.
    x = jnp.transpose(x_nchw, (0, 2, 3, 1)).reshape(N, HW, C)
    wd_t = jnp.transpose(w_down)          # (C, I)
    wu_t = jnp.transpose(w_up)            # (I, C)
    bd = b_down.reshape(1, I)
    bu = b_up.reshape(1, C)

    # Keep double-buffered input + output slabs within a conservative budget so
    # the same block size is safe on v5e/v6e (128 MiB VMEM) and v7x (64 MiB).
    vmem_budget = 24 * 1024 * 1024
    Nb = _pick_batch_block(N, HW, C, itemsize, vmem_budget)
    grid = (N // Nb,)

    cost = pl.CostEstimate(
        flops=2 * N * HW * C + 4 * N * C * I,
        transcendentals=N * C,
        bytes_accessed=2 * N * HW * C * itemsize + (2 * C * I + C + I) * 4,
    )

    out = pl.pallas_call(
        se_block_kernel,
        out_shape=jax.ShapeDtypeStruct((N, HW, C), x.dtype),
        grid_spec=pltpu.PrefetchScalarGridSpec(
            num_scalar_prefetch=0,
            grid=grid,
            in_specs=[
                pl.BlockSpec((Nb, HW, C), lambda n: (n, 0, 0)),   # x slab (Nb batches)
                pl.BlockSpec((C, I), lambda n: (0, 0)),           # down weight (C, I)
                pl.BlockSpec((1, I), lambda n: (0, 0)),           # down bias
                pl.BlockSpec((I, C), lambda n: (0, 0)),           # up weight (I, C)
                pl.BlockSpec((1, C), lambda n: (0, 0)),           # up bias
            ],
            out_specs=pl.BlockSpec((Nb, HW, C), lambda n: (n, 0, 0)),
        ),
        compiler_params=pltpu.CompilerParams(
            dimension_semantics=("parallel",),
            vmem_limit_bytes=32 * 1024 * 1024,
        ),
        cost_estimate=cost,
    )(x, wd_t, bd, wu_t, bu)

    return jnp.transpose(out.reshape(N, H, W, C), (0, 3, 1, 2))


def se_block_ref(x_nchw, w_down, b_down, w_up, b_up):
    """Pure-JAX reference matching the PyTorch forward."""
    pooled = jnp.mean(x_nchw, axis=(2, 3))                      # (N, C)
    hidden = jnp.maximum(pooled @ w_down.T + b_down, 0.0)       # (N, I)
    scale = jax.nn.sigmoid(hidden @ w_up.T + b_up)              # (N, C)
    return x_nchw * scale[:, :, None, None]


if __name__ == "__main__":
    # SEBlock(input_channels=4, internal_neurons=2)
    N, C, H, W = 2, 4, 16, 16
    I = 2

    key = jax.random.PRNGKey(0)
    kx, kwd, kbd, kwu, kbu = jax.random.split(key, 5)

    x = jax.random.normal(kx, (N, C, H, W), dtype=jnp.float32)
    # Conv2d weights are (out, in, 1, 1) in PyTorch; we keep the squeezed (out, in) form.
    w_down = jax.random.normal(kwd, (I, C), dtype=jnp.float32) * 0.1
    b_down = jax.random.normal(kbd, (I,), dtype=jnp.float32) * 0.1
    w_up = jax.random.normal(kwu, (C, I), dtype=jnp.float32) * 0.1
    b_up = jax.random.normal(kbu, (C,), dtype=jnp.float32) * 0.1

    out = se_block(x, w_down, b_down, w_up, b_up)
    out = jax.block_until_ready(out)

    ref = se_block_ref(x, w_down, b_down, w_up, b_up)
    assert out.shape == (N, C, H, W)
    assert jnp.allclose(out, ref, atol=1e-5, rtol=1e-5)

    print("KERNEL_OK")
</pallas_src>

<mosaic_0001>
module attributes {stable_mosaic.version = 11 : i64} {
  func.func @se_block_kernel(%arg0: i32, %arg1: memref<2x256x4xf32, #tpu.memory_space<vmem>>, %arg2: memref<4x2xf32, #tpu.memory_space<vmem>>, %arg3: memref<1x2xf32, #tpu.memory_space<vmem>>, %arg4: memref<2x4xf32, #tpu.memory_space<vmem>>, %arg5: memref<1x4xf32, #tpu.memory_space<vmem>>, %arg6: memref<2x256x4xf32, #tpu.memory_space<vmem>>) attributes {dimension_semantics = [#tpu.dimension_semantics<parallel>], iteration_bounds = array<i64: 1>, scalar_prefetch = 0 : i64, scratch_operands = 0 : i64, tpu.core_type = #tpu.core_type<tc>, window_params = [{transform_indices = @transform_0, window_bounds = array<i64: 2, 256, 4>}, {pipeline_mode = #tpu.pipeline_mode<synchronous>, transform_indices = @transform_1, window_bounds = array<i64: 4, 2>}, {pipeline_mode = #tpu.pipeline_mode<synchronous>, transform_indices = @transform_2, window_bounds = array<i64: 1, 2>}, {pipeline_mode = #tpu.pipeline_mode<synchronous>, transform_indices = @transform_3, window_bounds = array<i64: 2, 4>}, {pipeline_mode = #tpu.pipeline_mode<synchronous>, transform_indices = @transform_4, window_bounds = array<i64: 1, 4>}, {transform_indices = @transform_5, window_bounds = array<i64: 2, 256, 4>}]} {
    %c0 = arith.constant 0 : index
    %c0_0 = arith.constant 0 : index
    %c0_1 = arith.constant 0 : index
    %0 = vector.load %arg1[%c0, %c0_0, %c0_1] : memref<2x256x4xf32, #tpu.memory_space<vmem>>, vector<2x256x4xf32>
    %cst = arith.constant dense<0.000000e+00> : vector<2x4xf32>
    %1 = vector.multi_reduction <add>, %0, %cst [1] : vector<2x256x4xf32> to vector<2x4xf32>
    %cst_2 = arith.constant 2.560000e+02 : f32
    %2 = vector.broadcast %cst_2 : f32 to vector<2x4xf32>
    %3 = arith.divf %1, %2 : vector<2x4xf32>
    %c0_3 = arith.constant 0 : index
    %c0_4 = arith.constant 0 : index
    %4 = vector.load %arg2[%c0_3, %c0_4] : memref<4x2xf32, #tpu.memory_space<vmem>>, vector<4x2xf32>
    %cst_5 = arith.constant dense<0.000000e+00> : vector<2x2xf32>
    %5 = tpu.matmul %3, %4, %cst_5 {dimension_numbers = #tpu.dot_dimension_numbers<[1], [0], [0], [1], [0, 0, 1, 1], [], []>} : vector<2x4xf32>, vector<4x2xf32>, vector<2x2xf32> -> vector<2x2xf32>
    %c0_6 = arith.constant 0 : index
    %c0_7 = arith.constant 0 : index
    %6 = vector.load %arg3[%c0_6, %c0_7] : memref<1x2xf32, #tpu.memory_space<vmem>>, vector<1x2xf32>
    %7 = vector.broadcast %6 : vector<1x2xf32> to vector<2x2xf32>
    %8 = arith.addf %5, %7 : vector<2x2xf32>
    %cst_8 = arith.constant 0.000000e+00 : f32
    %9 = vector.broadcast %cst_8 : f32 to vector<2x2xf32>
    %10 = arith.maximumf %8, %9 : vector<2x2xf32>
    %c0_9 = arith.constant 0 : index
    %c0_10 = arith.constant 0 : index
    %11 = vector.load %arg4[%c0_9, %c0_10] : memref<2x4xf32, #tpu.memory_space<vmem>>, vector<2x4xf32>
    %cst_11 = arith.constant dense<0.000000e+00> : vector<2x4xf32>
    %12 = tpu.matmul %10, %11, %cst_11 {dimension_numbers = #tpu.dot_dimension_numbers<[1], [0], [0], [1], [0, 0, 1, 1], [], []>} : vector<2x2xf32>, vector<2x4xf32>, vector<2x4xf32> -> vector<2x4xf32>
    %c0_12 = arith.constant 0 : index
    %c0_13 = arith.constant 0 : index
    %13 = vector.load %arg5[%c0_12, %c0_13] : memref<1x4xf32, #tpu.memory_space<vmem>>, vector<1x4xf32>
    %14 = vector.broadcast %13 : vector<1x4xf32> to vector<2x4xf32>
    %15 = arith.addf %12, %14 : vector<2x4xf32>
    %16 = arith.negf %15 : vector<2x4xf32>
    %17 = math.exp %16 : vector<2x4xf32>
    %cst_14 = arith.constant 1.000000e+00 : f32
    %18 = vector.broadcast %cst_14 : f32 to vector<2x4xf32>
    %19 = arith.addf %18, %17 : vector<2x4xf32>
    %20 = arith.divf %18, %19 : vector<2x4xf32>
    %21 = vector.shape_cast %20 : vector<2x4xf32> to vector<2x1x4xf32>
    %c0_15 = arith.constant 0 : index
    %c0_16 = arith.constant 0 : index
    %c0_17 = arith.constant 0 : index
    %22 = vector.load %arg1[%c0_15, %c0_16, %c0_17] : memref<2x256x4xf32, #tpu.memory_space<vmem>>, vector<2x256x4xf32>
    %23 = vector.broadcast %21 : vector<2x1x4xf32> to vector<2x256x4xf32>
    %24 = arith.mulf %22, %23 : vector<2x256x4xf32>
    %c0_18 = arith.constant 0 : index
    %c0_19 = arith.constant 0 : index
    %c0_20 = arith.constant 0 : index
    %25 = vector.load %arg6[%c0_18, %c0_19, %c0_20] : memref<2x256x4xf32, #tpu.memory_space<vmem>>, vector<2x256x4xf32>
    tpu.vector_store %arg6[%c0_18, %c0_19, %c0_20], %24 {strides = array<i32>} : memref<2x256x4xf32, #tpu.memory_space<vmem>>, vector<2x256x4xf32>,
    return
  }
  func.func @transform_0(%arg0: i32) -> (i32, i32, i32) {
    %c0_i32 = arith.constant 0 : i32
    %c0_i32_0 = arith.constant 0 : i32
    %c0_i32_1 = arith.constant 0 : i32
    return %arg0, %c0_i32, %c0_i32_0 : i32, i32, i32
  }
  func.func @transform_1(%arg0: i32) -> (i32, i32) {
    %c0_i32 = arith.constant 0 : i32
    %c0_i32_0 = arith.constant 0 : i32
    %c0_i32_1 = arith.constant 0 : i32
    return %c0_i32, %c0_i32_0 : i32, i32
  }
  func.func @transform_2(%arg0: i32) -> (i32, i32) {
    %c0_i32 = arith.constant 0 : i32
    %c0_i32_0 = arith.constant 0 : i32
    %c0_i32_1 = arith.constant 0 : i32
    return %c0_i32, %c0_i32_0 : i32, i32
  }
  func.func @transform_3(%arg0: i32) -> (i32, i32) {
    %c0_i32 = arith.constant 0 : i32
    %c0_i32_0 = arith.constant 0 : i32
    %c0_i32_1 = arith.constant 0 : i32
    return %c0_i32, %c0_i32_0 : i32, i32
  }
  func.func @transform_4(%arg0: i32) -> (i32, i32) {
    %c0_i32 = arith.constant 0 : i32
    %c0_i32_0 = arith.constant 0 : i32
    %c0_i32_1 = arith.constant 0 : i32
    return %c0_i32, %c0_i32_0 : i32, i32
  }
  func.func @transform_5(%arg0: i32) -> (i32, i32, i32) {
    %c0_i32 = arith.constant 0 : i32
    %c0_i32_0 = arith.constant 0 : i32
    %c0_i32_1 = arith.constant 0 : i32
    return %arg0, %c0_i32, %c0_i32_0 : i32, i32, i32
  }
}

</mosaic_0001>

<llo_original>
// kernel: tpu_custom_call.1
$region0: #{tpu_custom_call.1}
  #allocation0 [shape = 'u32[]', space=smem, size = 0x4, offset = 0x4, fixed_abs, tag = 'smem constant byte address 0x4 - core index']
  #allocation1 [shape = 'u32[144,128]{1,0:T(1,128)}', space=vmem, size = 0x12000, scoped, tag = 'internal scratch']
  %s0 = inlined_call_operand.vmem [shape: f32[2,256,4], index: 0, kind: input, shape index: {}]
  %s1 = inlined_call_operand.vmem [shape: f32[4,2], index: 1, kind: input, shape index: {}]
  %s2 = inlined_call_operand.vmem [shape: f32[1,2], index: 2, kind: input, shape index: {}]
  %s3 = inlined_call_operand.vmem [shape: f32[2,4], index: 3, kind: input, shape index: {}]
  %s4 = inlined_call_operand.vmem [shape: f32[1,4], index: 4, kind: input, shape index: {}]
  %s5 = inlined_call_operand.vmem [shape: f32[2,256,4], index: 5, kind: output, shape index: {}]
  %s6 = sld [smem:[#allocation0]]
  $region30: #{tpu_custom_call.1} parent=0
    _
  %s8 = ssub.s32 1, %s6
  %s9 = scalar_select 0, %s8, %s6
  // Predicated region
  $region2: #{tpu_custom_call.1} parent=0 // pred_check
    _
  $region3: #{tpu_custom_call.1} parent=0 // pred_check_branch
    %11 = sbr.rel (0) target = $region5
  $region4: #{tpu_custom_call.1} parent=0 // pred_region
    _
  $region5: #{tpu_custom_call.1} parent=0 // pred_fallthru
    _
  // Predicated region
  $region6: #{tpu_custom_call.1} parent=0 // pred_check
    _
  $region7: #{tpu_custom_call.1} parent=0 // pred_check_branch
    %13 = sbr.rel (0) target = $region9
  $region8: #{tpu_custom_call.1} parent=0 // pred_region
    _
  $region9: #{tpu_custom_call.1} parent=0 // pred_fallthru
    _
  // Predicated region
  $region10: #{tpu_custom_call.1} parent=0 // pred_check
    _
  $region11: #{tpu_custom_call.1} parent=0 // pred_check_branch
    %15 = sbr.rel (0) target = $region13
  $region12: #{tpu_custom_call.1} parent=0 // pred_region
    _
  $region13: #{tpu_custom_call.1} parent=0 // pred_fallthru
    _
  // Predicated region
  $region14: #{tpu_custom_call.1} parent=0 // pred_check
    _
  $region15: #{tpu_custom_call.1} parent=0 // pred_check_branch
    %17 = sbr.rel (0) target = $region17
  $region16: #{tpu_custom_call.1} parent=0 // pred_region
    _
  $region17: #{tpu_custom_call.1} parent=0 // pred_fallthru
    _
  // Predicated region
  $region18: #{tpu_custom_call.1} parent=0 // pred_check
    _
  $region19: #{tpu_custom_call.1} parent=0 // pred_check_branch
    %19 = sbr.rel (0) target = $region21
  $region20: #{tpu_custom_call.1} parent=0 // pred_region
    _
  $region21: #{tpu_custom_call.1} parent=0 // pred_fallthru
    _
  %v20 = vld [vmem:[%s0] sm:$0xff]
  %v21 = vld [vmem:[%s0 + $0x8] sm:$0xff]
  %v22 = vld [vmem:[%s0 + $0x10] sm:$0xff]
  %v23 = vld [vmem:[%s0 + $0x18] sm:$0xff]
  %v24 = vld [vmem:[%s0 + $0x20] sm:$0xff]
  %v25 = vld [vmem:[%s0 + $0x28] sm:$0xff]
  %v26 = vld [vmem:[%s0 + $0x30] sm:$0xff]
  %v27 = vld [vmem:[%s0 + $0x38] sm:$0xff]
  %v28 = vld [vmem:[%s0 + $0x40] sm:$0xff]
  %v29 = vld [vmem:[%s0 + $0x48] sm:$0xff]
  %v30 = vld [vmem:[%s0 + $0x50] sm:$0xff]
  %v31 = vld [vmem:[%s0 + $0x58] sm:$0xff]
  %v32 = vld [vmem:[%s0 + $0x60] sm:$0xff]
  %v33 = vld [vmem:[%s0 + $0x68] sm:$0xff]
  %v34 = vld [vmem:[%s0 + $0x70] sm:$0xff]
  %v35 = vld [vmem:[%s0 + $0x78] sm:$0xff]
  %v36 = vld [vmem:[%s0 + $0x80] sm:$0xff]
  %v37 = vld [vmem:[%s0 + $0x88] sm:$0xff]
  %v38 = vld [vmem:[%s0 + $0x90] sm:$0xff]
  %v39 = vld [vmem:[%s0 + $0x98] sm:$0xff]
  %v40 = vld [vmem:[%s0 + $0xa0] sm:$0xff]
  %v41 = vld [vmem:[%s0 + $0xa8] sm:$0xff]
  %v42 = vld [vmem:[%s0 + $0xb0] sm:$0xff]
  %v43 = vld [vmem:[%s0 + $0xb8] sm:$0xff]
  %v44 = vld [vmem:[%s0 + $0xc0] sm:$0xff]
  %v45 = vld [vmem:[%s0 + $0xc8] sm:$0xff]
  %v46 = vld [vmem:[%s0 + $0xd0] sm:$0xff]
  %v47 = vld [vmem:[%s0 + $0xd8] sm:$0xff]
  %v48 = vld [vmem:[%s0 + $0xe0] sm:$0xff]
  %v49 = vld [vmem:[%s0 + $0xe8] sm:$0xff]
  %v50 = vld [vmem:[%s0 + $0xf0] sm:$0xff]
  %v51 = vld [vmem:[%s0 + $0xf8] sm:$0xff]
  %v52 = vld [vmem:[%s0 + $0x100] sm:$0xff]
  %v53 = vld [vmem:[%s0 + $0x108] sm:$0xff]
  %v54 = vld [vmem:[%s0 + $0x110] sm:$0xff]
  %v55 = vld [vmem:[%s0 + $0x118] sm:$0xff]
  %v56 = vld [vmem:[%s0 + $0x120] sm:$0xff]
  %v57 = vld [vmem:[%s0 + $0x128] sm:$0xff]
  %v58 = vld [vmem:[%s0 + $0x130] sm:$0xff]
  %v59 = vld [vmem:[%s0 + $0x138] sm:$0xff]
  %v60 = vld [vmem:[%s0 + $0x140] sm:$0xff]
  %v61 = vld [vmem:[%s0 + $0x148] sm:$0xff]
  %v62 = vld [vmem:[%s0 + $0x150] sm:$0xff]
  %v63 = vld [vmem:[%s0 + $0x158] sm:$0xff]
  %v64 = vld [vmem:[%s0 + $0x160] sm:$0xff]
  %v65 = vld [vmem:[%s0 + $0x168] sm:$0xff]
  %v66 = vld [vmem:[%s0 + $0x170] sm:$0xff]
  %v67 = vld [vmem:[%s0 + $0x178] sm:$0xff]
  %v68 = vld [vmem:[%s0 + $0x180] sm:$0xff]
  %v69 = vld [vmem:[%s0 + $0x188] sm:$0xff]
  %v70 = vld [vmem:[%s0 + $0x190] sm:$0xff]
  %v71 = vld [vmem:[%s0 + $0x198] sm:$0xff]
  %v72 = vld [vmem:[%s0 + $0x1a0] sm:$0xff]
  %v73 = vld [vmem:[%s0 + $0x1a8] sm:$0xff]
  %v74 = vld [vmem:[%s0 + $0x1b0] sm:$0xff]
  %v75 = vld [vmem:[%s0 + $0x1b8] sm:$0xff]
  %v76 = vld [vmem:[%s0 + $0x1c0] sm:$0xff]
  %v77 = vld [vmem:[%s0 + $0x1c8] sm:$0xff]
  %v78 = vld [vmem:[%s0 + $0x1d0] sm:$0xff]
  %v79 = vld [vmem:[%s0 + $0x1d8] sm:$0xff]
  %v80 = vld [vmem:[%s0 + $0x1e0] sm:$0xff]
  %v81 = vld [vmem:[%s0 + $0x1e8] sm:$0xff]
  %v82 = vld [vmem:[%s0 + $0x1f0] sm:$0xff]
  %v83 = vld [vmem:[%s0 + $0x1f8] sm:$0xff]
  %vm84 = vcmask 31744
  %v85 = vsel %vm84, %v20, 0.0
  %v86 = vsel %vm84, %v21, 0.0
  %v87 = vadd.f32 %v85, %v86
  %v88 = vsel %vm84, %v22, 0.0
  %v89 = vadd.f32 %v87, %v88
  %v90 = vsel %vm84, %v23, 0.0
  %v91 = vadd.f32 %v89, %v90
  %v92 = vsel %vm84, %v24, 0.0
  %v93 = vadd.f32 %v91, %v92
  %v94 = vsel %vm84, %v25, 0.0
  %v95 = vadd.f32 %v93, %v94
  %v96 = vsel %vm84, %v26, 0.0
  %v97 = vadd.f32 %v95, %v96
  %v98 = vsel %vm84, %v27, 0.0
  %v99 = vadd.f32 %v97, %v98
  %v100 = vsel %vm84, %v28, 0.0
  %v101 = vadd.f32 %v99, %v100
  %v102 = vsel %vm84, %v29, 0.0
  %v103 = vadd.f32 %v101, %v102
  %v104 = vsel %vm84, %v30, 0.0
  %v105 = vadd.f32 %v103, %v104
  %v106 = vsel %vm84, %v31, 0.0
  %v107 = vadd.f32 %v105, %v106
  %v108 = vsel %vm84, %v32, 0.0
  %v109 = vadd.f32 %v107, %v108
  %v110 = vsel %vm84, %v33, 0.0
  %v111 = vadd.f32 %v109, %v110
  %v112 = vsel %vm84, %v34, 0.0
  %v113 = vadd.f32 %v111, %v112
  %v114 = vsel %vm84, %v35, 0.0
  %v115 = vadd.f32 %v113, %v114
  %v116 = vsel %vm84, %v36, 0.0
  %v117 = vadd.f32 %v115, %v116
  %v118 = vsel %vm84, %v37, 0.0
  %v119 = vadd.f32 %v117, %v118
  %v120 = vsel %vm84, %v38, 0.0
  %v121 = vadd.f32 %v119, %v120
  %v122 = vsel %vm84, %v39, 0.0
  %v123 = vadd.f32 %v121, %v122
  %v124 = vsel %vm84, %v40, 0.0
  %v125 = vadd.f32 %v123, %v124
  %v126 = vsel %vm84, %v41, 0.0
  %v127 = vadd.f32 %v125, %v126
  %v128 = vsel %vm84, %v42, 0.0
  %v129 = vadd.f32 %v127, %v128
  %v130 = vsel %vm84, %v43, 0.0
  %v131 = vadd.f32 %v129, %v130
  %v132 = vsel %vm84, %v44, 0.0
  %v133 = vadd.f32 %v131, %v132
  %v134 = vsel %vm84, %v45, 0.0
  %v135 = vadd.f32 %v133, %v134
  %v136 = vsel %vm84, %v46, 0.0
  %v137 = vadd.f32 %v135, %v136
  %v138 = vsel %vm84, %v47, 0.0
  %v139 = vadd.f32 %v137, %v138
  %v140 = vsel %vm84, %v48, 0.0
  %v141 = vadd.f32 %v139, %v140
  %v142 = vsel %vm84, %v49, 0.0
  %v143 = vadd.f32 %v141, %v142
  %v144 = vsel %vm84, %v50, 0.0
  %v145 = vadd.f32 %v143, %v144
  %v146 = vsel %vm84, %v51, 0.0
  %v147 = vadd.f32 %v145, %v146
  %v148 = vrot.slane %v147, 4
  %v149 = vadd.f32 %v147, %v148
  %v150 = vrot.slane %v149, 2
  %v151 = vadd.f32 %v149, %v150
  %v152 = vrot.slane %v151, 1
  %v153 = vadd.f32 %v151, %v152
  %v154 = vsel %vm84, %v52, 0.0
  %v155 = vsel %vm84, %v53, 0.0
  %v156 = vadd.f32 %v154, %v155
  %v157 = vsel %vm84, %v54, 0.0
  %v158 = vadd.f32 %v156, %v157
  %v159 = vsel %vm84, %v55, 0.0
  %v160 = vadd.f32 %v158, %v159
  %v161 = vsel %vm84, %v56, 0.0
  %v162 = vadd.f32 %v160, %v161
  %v163 = vsel %vm84, %v57, 0.0
  %v164 = vadd.f32 %v162, %v163
  %v165 = vsel %vm84, %v58, 0.0
  %v166 = vadd.f32 %v164, %v165
  %v167 = vsel %vm84, %v59, 0.0
  %v168 = vadd.f32 %v166, %v167
  %v169 = vsel %vm84, %v60, 0.0
  %v170 = vadd.f32 %v168, %v169
  %v171 = vsel %vm84, %v61, 0.0
  %v172 = vadd.f32 %v170, %v171
  %v173 = vsel %vm84, %v62, 0.0
  %v174 = vadd.f32 %v172, %v173
  %v175 = vsel %vm84, %v63, 0.0
  %v176 = vadd.f32 %v174, %v175
  %v177 = vsel %vm84, %v64, 0.0
  %v178 = vadd.f32 %v176, %v177
  %v179 = vsel %vm84, %v65, 0.0
  %v180 = vadd.f32 %v178, %v179
  %v181 = vsel %vm84, %v66, 0.0
  %v182 = vadd.f32 %v180, %v181
  %v183 = vsel %vm84, %v67, 0.0
  %v184 = vadd.f32 %v182, %v183
  %v185 = vsel %vm84, %v68, 0.0
  %v186 = vadd.f32 %v184, %v185
  %v187 = vsel %vm84, %v69, 0.0
  %v188 = vadd.f32 %v186, %v187
  %v189 = vsel %vm84, %v70, 0.0
  %v190 = vadd.f32 %v188, %v189
  %v191 = vsel %vm84, %v71, 0.0
  %v192 = vadd.f32 %v190, %v191
  %v193 = vsel %vm84, %v72, 0.0
  %v194 = vadd.f32 %v192, %v193
  %v195 = vsel %vm84, %v73, 0.0
  %v196 = vadd.f32 %v194, %v195
  %v197 = vsel %vm84, %v74, 0.0
  %v198 = vadd.f32 %v196, %v197
  %v199 = vsel %vm84, %v75, 0.0
  %v200 = vadd.f32 %v198, %v199
  %v201 = vsel %vm84, %v76, 0.0
  %v202 = vadd.f32 %v200, %v201
  %v203 = vsel %vm84, %v77, 0.0
  %v204 = vadd.f32 %v202, %v203
  %v205 = vsel %vm84, %v78, 0.0
  %v206 = vadd.f32 %v204, %v205
  %v207 = vsel %vm84, %v79, 0.0
  %v208 = vadd.f32 %v206, %v207
  %v209 = vsel %vm84, %v80, 0.0
  %v210 = vadd.f32 %v208, %v209
  %v211 = vsel %vm84, %v81, 0.0
  %v212 = vadd.f32 %v210, %v211
  %v213 = vsel %vm84, %v82, 0.0
  %v214 = vadd.f32 %v212, %v213
  %v215 = vsel %vm84, %v83, 0.0
  %v216 = vadd.f32 %v214, %v215
  %v217 = vrot.slane %v216, 4
  %v218 = vadd.f32 %v216, %v217
  %v219 = vrot.slane %v218, 2
  %v220 = vadd.f32 %v218, %v219
  %v221 = vrot.slane %v220, 1
  %v222 = vadd.f32 %v220, %v221
  %v223 = vrcp.pop 256.0
  %v224 = vmul.f32 %v153, %v223
  %v225 = vmul.f32 %v222, %v223
  %v226 = vld [vmem:[%s1] sm:$0xf]
  %v227 = vld [vmem:[%s2] sm:$0x1]
  %v229 = vlaneseq
  %v230 = vshrl.u32 %v229, 7
  %v231 = vsub.s32 0, %v230
  %v232 = vrot.slane %v227, %v231
  %vm236 = vcmask 1041409
  %v237 = vsel %vm236, %v225, %v224
  %v238 = vsel %vm84, %v237, 0
  %vm240 = vcmask 1043456
  %v242 = vsel %vm240, %v226, 0
  %244 = vmatprep.subr.mxu0 0.0
  %245 = vmatpush1.msra.mxu0 %v242
  %246 = vmatprep.subr.mxu0 0.0
  %247 = vmatpush1.msra.mxu0 0.0
  %248 = vmatprep.subr.mxu0 0.0
  %249 = vmatpush1.msra.mxu0 0.0
  %250 = vmatprep.subr.mxu0 0.0
  %251 = vmatpush1.msra.mxu0 0.0
  %252 = vmatprep.subr.mxu0 0.0
  %253 = vmatpush1.msra.mxu0 0.0
  %254 = vmatprep.subr.mxu0 0.0
  %255 = vmatpush1.msra.mxu0 0.0
  %256 = vmatprep.subr.mxu0 0.0
  %257 = vmatpush1.msra.mxu0 0.0
  %258 = vmatprep.subr.mxu0 0.0
  %259 = vmatpush1.msra.mxu0 0.0
  %260 = vmatprep.subr.mxu0 0.0
  %261 = vmatpush1.msra.mxu0 0.0
  %262 = vmatprep.subr.mxu0 0.0
  %263 = vmatpush1.msra.mxu0 0.0
  %264 = vmatprep.subr.mxu0 0.0
  %265 = vmatpush1.msra.mxu0 0.0
  %266 = vmatprep.subr.mxu0 0.0
  %267 = vmatpush1.msra.mxu0 0.0
  %268 = vmatprep.subr.mxu0 0.0
  %269 = vmatpush1.msra.mxu0 0.0
  %270 = vmatprep.subr.mxu0 0.0
  %271 = vmatpush1.msra.mxu0 0.0
  %272 = vmatprep.subr.mxu0 0.0
  %273 = vmatpush1.msra.mxu0 0.0
  %274 = vmatprep.subr.mxu0 0.0
  %275 = vmatpush1.msra.mxu0 0.0
  %276 = vmatprep.subr.mxu0 0.0
  %277 = vmatpush1.msra.mxu0 0.0
  %278 = vmatprep.subr.mxu0 0.0
  %279 = vmatpush1.msra.mxu0 0.0
  %280 = vmatprep.subr.mxu0 0.0
  %281 = vmatpush1.msra.mxu0 0.0
  %282 = vmatprep.subr.mxu0 0.0
  %283 = vmatpush1.msra.mxu0 0.0
  %284 = vmatprep.subr.mxu0 0.0
  %285 = vmatpush1.msra.mxu0 0.0
  %286 = vmatprep.subr.mxu0 0.0
  %287 = vmatpush1.msra.mxu0 0.0
  %288 = vmatprep.subr.mxu0 0.0
  %289 = vmatpush1.msra.mxu0 0.0
  %290 = vmatprep.subr.mxu0 0.0
  %291 = vmatpush1.msra.mxu0 0.0
  %292 = vmatprep.subr.mxu0 0.0
  %293 = vmatpush1.msra.mxu0 0.0
  %294 = vmatprep.subr.mxu0 0.0
  %295 = vmatpush1.msra.mxu0 0.0
  %296 = vmatprep.subr.mxu0 0.0
  %297 = vmatpush1.msra.mxu0 0.0
  %298 = vmatprep.subr.mxu0 0.0
  %299 = vmatpush1.msra.mxu0 0.0
  %300 = vmatprep.subr.mxu0 0.0
  %301 = vmatpush1.msra.mxu0 0.0
  %302 = vmatprep.subr.mxu0 0.0
  %303 = vmatpush1.msra.mxu0 0.0
  %304 = vmatprep.subr.mxu0 0.0
  %305 = vmatpush1.msra.mxu0 0.0
  %306 = vmatprep.subr.mxu0 0.0
  %307 = vmatpush1.msra.mxu0 0.0
  %308 = vmatprep.mubr.f32.mxu0 0.0
  %309 = vmatmul.mubr.f32.gmra.mrb[0].mxu0 %v238
  %v310 = vpop.f32.mrb[0].mxu0
  %v311 = vadd.f32 %v232, %v310
  %v312 = vpop.f32.mrb[0].mxu0
  %313 = vdwg.mxu0
  %v314 = vmax.f32 %v311, 0.0
  %v315 = vld [vmem:[%s3] sm:$0x3]
  %v316 = vld [vmem:[%s4] sm:$0x1]
  %v318 = vlaneseq
  %v319 = vshrl.u32 %v318, 7
  %v320 = vsub.s32 0, %v319
  %v321 = vrot.slane %v316, %v320
  %vm323 = vcmask 15360
  %v325 = vsel %vm323, %v314, 0
  %vm327 = vcmask 1041408
  %v329 = vsel %vm327, %v315, 0
  %331 = vmatprep.subr.mxu0 0.0
  %332 = vmatpush1.msra.mxu0 %v329
  %333 = vmatprep.subr.mxu0 0.0
  %334 = vmatpush1.msra.mxu0 0.0
  %335 = vmatprep.subr.mxu0 0.0
  %336 = vmatpush1.msra.mxu0 0.0
  %337 = vmatprep.subr.mxu0 0.0
  %338 = vmatpush1.msra.mxu0 0.0
  %339 = vmatprep.subr.mxu0 0.0
  %340 = vmatpush1.msra.mxu0 0.0
  %341 = vmatprep.subr.mxu0 0.0
  %342 = vmatpush1.msra.mxu0 0.0
  %343 = vmatprep.subr.mxu0 0.0
  %344 = vmatpush1.msra.mxu0 0.0
  %345 = vmatprep.subr.mxu0 0.0
  %346 = vmatpush1.msra.mxu0 0.0
  %347 = vmatprep.subr.mxu0 0.0
  %348 = vmatpush1.msra.mxu0 0.0
  %349 = vmatprep.subr.mxu0 0.0
  %350 = vmatpush1.msra.mxu0 0.0
  %351 = vmatprep.subr.mxu0 0.0
  %352 = vmatpush1.msra.mxu0 0.0
  %353 = vmatprep.subr.mxu0 0.0
  %354 = vmatpush1.msra.mxu0 0.0
  %355 = vmatprep.subr.mxu0 0.0
  %356 = vmatpush1.msra.mxu0 0.0
  %357 = vmatprep.subr.mxu0 0.0
  %358 = vmatpush1.msra.mxu0 0.0
  %359 = vmatprep.subr.mxu0 0.0
  %360 = vmatpush1.msra.mxu0 0.0
  %361 = vmatprep.subr.mxu0 0.0
  %362 = vmatpush1.msra.mxu0 0.0
  %363 = vmatprep.subr.mxu0 0.0
  %364 = vmatpush1.msra.mxu0 0.0
  %365 = vmatprep.subr.mxu0 0.0
  %366 = vmatpush1.msra.mxu0 0.0
  %367 = vmatprep.subr.mxu0 0.0
  %368 = vmatpush1.msra.mxu0 0.0
  %369 = vmatprep.subr.mxu0 0.0
  %370 = vmatpush1.msra.mxu0 0.0
  %371 = vmatprep.subr.mxu0 0.0
  %372 = vmatpush1.msra.mxu0 0.0
  %373 = vmatprep.subr.mxu0 0.0
  %374 = vmatpush1.msra.mxu0 0.0
  %375 = vmatprep.subr.mxu0 0.0
  %376 = vmatpush1.msra.mxu0 0.0
  %377 = vmatprep.subr.mxu0 0.0
  %378 = vmatpush1.msra.mxu0 0.0
  %379 = vmatprep.subr.mxu0 0.0
  %380 = vmatpush1.msra.mxu0 0.0
  %381 = vmatprep.subr.mxu0 0.0
  %382 = vmatpush1.msra.mxu0 0.0
  %383 = vmatprep.subr.mxu0 0.0
  %384 = vmatpush1.msra.mxu0 0.0
  %385 = vmatprep.subr.mxu0 0.0
  %386 = vmatpush1.msra.mxu0 0.0
  %387 = vmatprep.subr.mxu0 0.0
  %388 = vmatpush1.msra.mxu0 0.0
  %389 = vmatprep.subr.mxu0 0.0
  %390 = vmatpush1.msra.mxu0 0.0
  %391 = vmatprep.subr.mxu0 0.0
  %392 = vmatpush1.msra.mxu0 0.0
  %393 = vmatprep.subr.mxu0 0.0
  %394 = vmatpush1.msra.mxu0 0.0
  %395 = vmatprep.mubr.f32.mxu0 0.0
  %396 = vmatmul.mubr.f32.gmra.mrb[0].mxu0 %v325
  %v397 = vpop.f32.mrb[0].mxu0
  %v398 = vadd.f32 %v321, %v397
  %v399 = vpop.f32.mrb[0].mxu0
  %400 = vdwg.mxu0
  %v401 = vxor.u32 %v398, 2147483648
  %v402 = vmul.f32 %v401, 1.442695
  %v403 = vpow.pop %v402
  %v404 = vadd.f32 %v403, 1.0
  %v405 = vrcp.pop %v404
  %v406 = vmul.f32 1.0, %v405
  %v409 = vunpack.c.l.s4 1966171168
  %v410 = vunpack.c.0.s8 %v409
  %v411 = vlaneseq
  %v412 = vshrl.u32 %v411, 7
  %v413 = vsub.s32 %v410, %v412
  %v414 = vrot.slane %v406, %v413
  %v415 = vcombine.high %v414, %v414
  %v417 = vunpack.c.l.s4 1966171168
  %v418 = vunpack.c.0.s8 %v417
  %v419 = vlaneseq
  %v420 = vshrl.u32 %v419, 7
  %v421 = vsub.s32 %v418, %v420
  %v422 = vrot.slane %v414, %v421
  %v424 = vunpack.c.l.s4 1966171168
  %v425 = vunpack.c.0.s8 %v424
  %v426 = vlaneseq
  %v427 = vshrl.u32 %v426, 7
  %v428 = vsub.s32 %v425, %v427
  %v429 = vrot.slane %v415, %v428
  %v430 = vlaneseq
  %v431 = vshrl.u32 %v430, 7
  %v432 = vsub.s32 0, %v431
  %v433 = vrot.slane %v422, %v432
  %v434 = vlaneseq
  %v435 = vshrl.u32 %v434, 7
  %v436 = vsub.s32 0, %v435
  %v437 = vrot.slane %v429, %v436
  %v440 = vmul.f32 %v20, %v433
  %v441 = vmul.f32 %v21, %v433
  %v442 = vmul.f32 %v22, %v433
  %v443 = vmul.f32 %v23, %v433
  %v444 = vmul.f32 %v24, %v433
  %v445 = vmul.f32 %v25, %v433
  %v446 = vmul.f32 %v26, %v433
  %v447 = vmul.f32 %v27, %v433
  %v448 = vmul.f32 %v28, %v433
  %v449 = vmul.f32 %v29, %v433
  %v450 = vmul.f32 %v30, %v433
  %v451 = vmul.f32 %v31, %v433
  %v452 = vmul.f32 %v32, %v433
  %v453 = vmul.f32 %v33, %v433
  %v454 = vmul.f32 %v34, %v433
  %v455 = vmul.f32 %v35, %v433
  %v456 = vmul.f32 %v36, %v433
  %v457 = vmul.f32 %v37, %v433
  %v458 = vmul.f32 %v38, %v433
  %v459 = vmul.f32 %v39, %v433
  %v460 = vmul.f32 %v40, %v433
  %v461 = vmul.f32 %v41, %v433
  %v462 = vmul.f32 %v42, %v433
  %v463 = vmul.f32 %v43, %v433
  %v464 = vmul.f32 %v44, %v433
  %v465 = vmul.f32 %v45, %v433
  %v466 = vmul.f32 %v46, %v433
  %v467 = vmul.f32 %v47, %v433
  %v468 = vmul.f32 %v48, %v433
  %v469 = vmul.f32 %v49, %v433
  %v470 = vmul.f32 %v50, %v433
  %v471 = vmul.f32 %v51, %v433
  %v472 = vmul.f32 %v52, %v437
  %v473 = vmul.f32 %v53, %v437
  %v474 = vmul.f32 %v54, %v437
  %v475 = vmul.f32 %v55, %v437
  %v476 = vmul.f32 %v56, %v437
  %v477 = vmul.f32 %v57, %v437
  %v478 = vmul.f32 %v58, %v437
  %v479 = vmul.f32 %v59, %v437
  %v480 = vmul.f32 %v60, %v437
  %v481 = vmul.f32 %v61, %v437
  %v482 = vmul.f32 %v62, %v437
  %v483 = vmul.f32 %v63, %v437
  %v484 = vmul.f32 %v64, %v437
  %v485 = vmul.f32 %v65, %v437
  %v486 = vmul.f32 %v66, %v437
  %v487 = vmul.f32 %v67, %v437
  %v488 = vmul.f32 %v68, %v437
  %v489 = vmul.f32 %v69, %v437
  %v490 = vmul.f32 %v70, %v437
  %v491 = vmul.f32 %v71, %v437
  %v492 = vmul.f32 %v72, %v437
  %v493 = vmul.f32 %v73, %v437
  %v494 = vmul.f32 %v74, %v437
  %v495 = vmul.f32 %v75, %v437
  %v496 = vmul.f32 %v76, %v437
  %v497 = vmul.f32 %v77, %v437
  %v498 = vmul.f32 %v78, %v437
  %v499 = vmul.f32 %v79, %v437
  %v500 = vmul.f32 %v80, %v437
  %v501 = vmul.f32 %v81, %v437
  %v502 = vmul.f32 %v82, %v437
  %v503 = vmul.f32 %v83, %v437
  %504 = vst.msk [vmem:[%s5] sm:$0xff] %vm84, %v440
  %505 = vst.msk [vmem:[%s5 + $0x8] sm:$0xff] %vm84, %v441
  %506 = vst.msk [vmem:[%s5 + $0x10] sm:$0xff] %vm84, %v442
  %507 = vst.msk [vmem:[%s5 + $0x18] sm:$0xff] %vm84, %v443
  %508 = vst.msk [vmem:[%s5 + $0x20] sm:$0xff] %vm84, %v444
  %509 = vst.msk [vmem:[%s5 + $0x28] sm:$0xff] %vm84, %v445
  %510 = vst.msk [vmem:[%s5 + $0x30] sm:$0xff] %vm84, %v446
  %511 = vst.msk [vmem:[%s5 + $0x38] sm:$0xff] %vm84, %v447
  %512 = vst.msk [vmem:[%s5 + $0x40] sm:$0xff] %vm84, %v448
  %513 = vst.msk [vmem:[%s5 + $0x48] sm:$0xff] %vm84, %v449
  %514 = vst.msk [vmem:[%s5 + $0x50] sm:$0xff] %vm84, %v450
  %515 = vst.msk [vmem:[%s5 + $0x58] sm:$0xff] %vm84, %v451
  %516 = vst.msk [vmem:[%s5 + $0x60] sm:$0xff] %vm84, %v452
  %517 = vst.msk [vmem:[%s5 + $0x68] sm:$0xff] %vm84, %v453
  %518 = vst.msk [vmem:[%s5 + $0x70] sm:$0xff] %vm84, %v454
  %519 = vst.msk [vmem:[%s5 + $0x78] sm:$0xff] %vm84, %v455
  %520 = vst.msk [vmem:[%s5 + $0x80] sm:$0xff] %vm84, %v456
  %521 = vst.msk [vmem:[%s5 + $0x88] sm:$0xff] %vm84, %v457
  %522 = vst.msk [vmem:[%s5 + $0x90] sm:$0xff] %vm84, %v458
  %523 = vst.msk [vmem:[%s5 + $0x98] sm:$0xff] %vm84, %v459
  %524 = vst.msk [vmem:[%s5 + $0xa0] sm:$0xff] %vm84, %v460
  %525 = vst.msk [vmem:[%s5 + $0xa8] sm:$0xff] %vm84, %v461
  %526 = vst.msk [vmem:[%s5 + $0xb0] sm:$0xff] %vm84, %v462
  %527 = vst.msk [vmem:[%s5 + $0xb8] sm:$0xff] %vm84, %v463
  %528 = vst.msk [vmem:[%s5 + $0xc0] sm:$0xff] %vm84, %v464
  %529 = vst.msk [vmem:[%s5 + $0xc8] sm:$0xff] %vm84, %v465
  %530 = vst.msk [vmem:[%s5 + $0xd0] sm:$0xff] %vm84, %v466
  %531 = vst.msk [vmem:[%s5 + $0xd8] sm:$0xff] %vm84, %v467
  %532 = vst.msk [vmem:[%s5 + $0xe0] sm:$0xff] %vm84, %v468
  %533 = vst.msk [vmem:[%s5 + $0xe8] sm:$0xff] %vm84, %v469
  %534 = vst.msk [vmem:[%s5 + $0xf0] sm:$0xff] %vm84, %v470
  %535 = vst.msk [vmem:[%s5 + $0xf8] sm:$0xff] %vm84, %v471
  %536 = vst.msk [vmem:[%s5 + $0x100] sm:$0xff] %vm84, %v472
  %537 = vst.msk [vmem:[%s5 + $0x108] sm:$0xff] %vm84, %v473
  %538 = vst.msk [vmem:[%s5 + $0x110] sm:$0xff] %vm84, %v474
  %539 = vst.msk [vmem:[%s5 + $0x118] sm:$0xff] %vm84, %v475
  %540 = vst.msk [vmem:[%s5 + $0x120] sm:$0xff] %vm84, %v476
  %541 = vst.msk [vmem:[%s5 + $0x128] sm:$0xff] %vm84, %v477
  %542 = vst.msk [vmem:[%s5 + $0x130] sm:$0xff] %vm84, %v478
  %543 = vst.msk [vmem:[%s5 + $0x138] sm:$0xff] %vm84, %v479
  %544 = vst.msk [vmem:[%s5 + $0x140] sm:$0xff] %vm84, %v480
  %545 = vst.msk [vmem:[%s5 + $0x148] sm:$0xff] %vm84, %v481
  %546 = vst.msk [vmem:[%s5 + $0x150] sm:$0xff] %vm84, %v482
  %547 = vst.msk [vmem:[%s5 + $0x158] sm:$0xff] %vm84, %v483
  %548 = vst.msk [vmem:[%s5 + $0x160] sm:$0xff] %vm84, %v484
  %549 = vst.msk [vmem:[%s5 + $0x168] sm:$0xff] %vm84, %v485
  %550 = vst.msk [vmem:[%s5 + $0x170] sm:$0xff] %vm84, %v486
  %551 = vst.msk [vmem:[%s5 + $0x178] sm:$0xff] %vm84, %v487
  %552 = vst.msk [vmem:[%s5 + $0x180] sm:$0xff] %vm84, %v488
  %553 = vst.msk [vmem:[%s5 + $0x188] sm:$0xff] %vm84, %v489
  %554 = vst.msk [vmem:[%s5 + $0x190] sm:$0xff] %vm84, %v490
  %555 = vst.msk [vmem:[%s5 + $0x198] sm:$0xff] %vm84, %v491
  %556 = vst.msk [vmem:[%s5 + $0x1a0] sm:$0xff] %vm84, %v492
  %557 = vst.msk [vmem:[%s5 + $0x1a8] sm:$0xff] %vm84, %v493
  %558 = vst.msk [vmem:[%s5 + $0x1b0] sm:$0xff] %vm84, %v494
  %559 = vst.msk [vmem:[%s5 + $0x1b8] sm:$0xff] %vm84, %v495
  %560 = vst.msk [vmem:[%s5 + $0x1c0] sm:$0xff] %vm84, %v496
  %561 = vst.msk [vmem:[%s5 + $0x1c8] sm:$0xff] %vm84, %v497
  %562 = vst.msk [vmem:[%s5 + $0x1d0] sm:$0xff] %vm84, %v498
  %563 = vst.msk [vmem:[%s5 + $0x1d8] sm:$0xff] %vm84, %v499
  %564 = vst.msk [vmem:[%s5 + $0x1e0] sm:$0xff] %vm84, %v500
  %565 = vst.msk [vmem:[%s5 + $0x1e8] sm:$0xff] %vm84, %v501
  %566 = vst.msk [vmem:[%s5 + $0x1f0] sm:$0xff] %vm84, %v502
  %567 = vst.msk [vmem:[%s5 + $0x1f8] sm:$0xff] %vm84, %v503
  // Predicated region
  $region22: #{tpu_custom_call.1} parent=0 // pred_check
    _
  $region23: #{tpu_custom_call.1} parent=0 // pred_check_branch
    %569 = sbr.rel (0) target = $region25
  $region24: #{tpu_custom_call.1} parent=0 // pred_region
    _
  $region25: #{tpu_custom_call.1} parent=0 // pred_fallthru
    _
  // Predicated region
  $region26: #{tpu_custom_call.1} parent=0 // pred_check
    _
  $region27: #{tpu_custom_call.1} parent=0 // pred_check_branch
    %571 = sbr.rel (0) target = $region29
  $region28: #{tpu_custom_call.1} parent=0 // pred_region
    _
  $region29: #{tpu_custom_call.1} parent=0 // pred_fallthru
    _

</llo_original>
